<compile_context>
chip_gen: v5e
topology: v5e:2x2
jax: 0.10.0
libtpu: 0.0.40
codegen_flags: <defaults>
</compile_context>

<pallas_src>
import jax
import jax.numpy as jnp
from jax.experimental import pallas as pl
from jax.experimental.pallas import tpu as pltpu

HIDDEN = 128
_FAST_PATH_MAX_B = 128  # below this, plain XLA beats kernel-launch + padding cost


def _round_up(x, m):
    return ((x + m - 1) // m) * m


def _mlp_kernel(z_ref, a_ref, w1z_ref, w1a_ref, b1_ref,
                w2_ref, b2_ref, w3_ref, b3_ref, out_ref):
    """One batch tile of relu(relu([z,a]@W1+b1)@W2+b2)@W3+b3."""
    wdt = w1z_ref.dtype
    z = z_ref[...].astype(wdt)
    a = a_ref[...].astype(wdt)

    # Layer 1 (concat-free): [z, a] @ W1 == z @ W1_z + a @ W1_a
    h1 = jnp.dot(z, w1z_ref[...], preferred_element_type=jnp.float32)
    h1 = h1 + jnp.dot(a, w1a_ref[...], preferred_element_type=jnp.float32)
    h1 = jnp.maximum(h1 + b1_ref[...], 0.0)                       # f32 VPU math

    # Layer 2
    h2 = jnp.dot(h1.astype(wdt), w2_ref[...], preferred_element_type=jnp.float32)
    h2 = jnp.maximum(h2 + b2_ref[...], 0.0)

    # Layer 3 — last dim of the output block equals the full array dim, so
    # this is a legal (masked) store with no lane padding.
    out = jnp.dot(h2.astype(wdt), w3_ref[...], preferred_element_type=jnp.float32)
    out_ref[...] = (out + b3_ref[...]).astype(out_ref.dtype)


def _normalize_params(params):
    """Accept 1-D or (1, n) biases; weights stay [in_features, out_features]."""
    w1, b1, w2, b2, w3, b3 = params
    b1 = jnp.reshape(b1, (1, -1)).astype(jnp.float32)
    b2 = jnp.reshape(b2, (1, -1)).astype(jnp.float32)
    b3 = jnp.reshape(b3, (1, -1)).astype(jnp.float32)
    return w1, b1, w2, b2, w3, b3


def _xla_forward(z, a, params):
    """Plain-JAX fast path for tiny batches (same math, same bf16 weights)."""
    w1, b1, w2, b2, w3, b3 = _normalize_params(params)
    f32 = jnp.float32
    za = jnp.concatenate([z, a], axis=-1)
    h = jnp.maximum(jnp.dot(za, w1.astype(f32)) + b1, 0.0)
    h = jnp.maximum(jnp.dot(h, w2.astype(f32)) + b2, 0.0)
    return (jnp.dot(h, w3.astype(f32)) + b3).astype(z.dtype)


def dynamics_predictor_forward(z, a, params, *, tm=1024, interpret=False,
                               force_pallas=False):
    """z: (B, latent_dim), a: (B, action_dim) -> (B, latent_dim)."""
    B, latent_dim = z.shape
    action_dim = a.shape[1]

    # Small-batch fast path: kernel launch + padding cost dominates a few-kFLOP
    # network; plain XLA is strictly faster there.
    if not force_pallas and B <= _FAST_PATH_MAX_B:
        return _xla_forward(z, a, params)

    w1, b1, w2, b2, w3, b3 = _normalize_params(params)
    assert w1.shape[0] == latent_dim + action_dim
    n_out = w3.shape[1]

    # Split W1 rows so the kernel never needs a concatenated [z, a] in HBM.
    w1z = w1[:latent_dim]
    w1a = w1[latent_dim:]

    # Batch tiling:
    #   * tile <= requested tm and <= B (rounded to sublane multiple of 8)
    #   * cap at ~B/2 so the grid has >=2 steps -> both v7x TensorCores get work
    tm_req = max(8, _round_up(min(tm, B), 8))
    half = max(8, _round_up(-(-B // 2), 8))
    tm_eff = min(tm_req, half)
    b_pad = _round_up(B, tm_eff)
    if b_pad != B:
        z = jnp.pad(z, ((0, b_pad - B), (0, 0)))
        a = jnp.pad(a, ((0, b_pad - B), (0, 0)))

    grid = (b_pad // tm_eff,)

    def batch_spec(cols):
        return pl.BlockSpec((tm_eff, cols), lambda i: (i, 0))

    def resident(arr):  # same block every grid step -> stays in VMEM
        return pl.BlockSpec(arr.shape, lambda i: (0, 0))

    # Advisory cost model so XLA schedules surrounding ops sensibly.
    flops = 2 * b_pad * ((latent_dim + action_dim) * HIDDEN
                         + HIDDEN * HIDDEN + HIDDEN * n_out)
    weight_bytes = sum(int(x.size) * x.dtype.itemsize
                       for x in (w1z, w1a, b1, w2, b2, w3, b3))
    bytes_accessed = (int(z.size) * z.dtype.itemsize
                      + int(a.size) * a.dtype.itemsize
                      + weight_bytes
                      + b_pad * n_out * z.dtype.itemsize)
    cost = pl.CostEstimate(flops=flops, transcendentals=0,
                           bytes_accessed=bytes_accessed)

    out = pl.pallas_call(
        _mlp_kernel,
        out_shape=jax.ShapeDtypeStruct((b_pad, n_out), z.dtype),
        grid=grid,
        in_specs=[
            batch_spec(latent_dim),               # z  (blocked over batch)
            batch_spec(action_dim),               # a  (blocked over batch)
            resident(w1z), resident(w1a), resident(b1),
            resident(w2), resident(b2),
            resident(w3), resident(b3),
        ],
        out_specs=pl.BlockSpec((tm_eff, n_out), lambda i: (i, 0)),
        compiler_params=pltpu.CompilerParams(
            dimension_semantics=("parallel",),    # megacore split on v7x
            vmem_limit_bytes=16 << 20,            # generous; real use < 4 MiB
        ),
        cost_estimate=cost,
        interpret=interpret,
    )(z, a, w1z, w1a, b1, w2, b2, w3, b3)

    # Strip batch padding (no lane padding to strip).
    return out[:B] if b_pad != B else out


def init_params(key, latent_dim, action_dim, hidden=HIDDEN,
                w_dtype=jnp.bfloat16, b_dtype=jnp.float32):
    """PyTorch nn.Linear-style init (uniform +/- 1/sqrt(fan_in)).

    Weights are stored as [in_features, out_features] (transposed vs PyTorch's
    [out, in]) so the kernel computes x @ W directly.  Weights in bf16 (MXU),
    biases in f32 (VPU).
    """
    in_dim = latent_dim + action_dim
    dims = [(in_dim, hidden), (hidden, hidden), (hidden, latent_dim)]
    params = []
    for fan_in, fan_out in dims:
        key, kw, kb = jax.random.split(key, 3)
        bound = 1.0 / float(jnp.sqrt(jnp.float32(fan_in)))
        w = jax.random.uniform(kw, (fan_in, fan_out), jnp.float32, -bound, bound)
        b = jax.random.uniform(kb, (1, fan_out), jnp.float32, -bound, bound)
        params.extend([w.astype(w_dtype), b.astype(b_dtype)])
    return tuple(params)


def _reference(z, a, params):
    w1, b1, w2, b2, w3, b3 = _normalize_params(params)
    w1f, w2f, w3f = (w.astype(jnp.float32) for w in (w1, w2, w3))
    za = jnp.concatenate([z, a], axis=-1)
    ref = jnp.maximum(za @ w1f + b1, 0.0)
    ref = jnp.maximum(ref @ w2f + b2, 0.0)
    return ref @ w3f + b3


if __name__ == "__main__":
    latent_dim = 32
    action_dim = 8

    key = jax.random.PRNGKey(0)
    kp, kz, ka = jax.random.split(key, 3)
    params = init_params(kp, latent_dim, action_dim)

    # --- Small batch: exercises both the Pallas kernel (forced) and fast path.
    batch = 8
    z = jax.random.normal(kz, (batch, latent_dim), jnp.float32)
    a = jax.random.normal(ka, (batch, action_dim), jnp.float32)

    out_pallas = dynamics_predictor_forward(z, a, params, force_pallas=True)
    out_fast = dynamics_predictor_forward(z, a, params)          # XLA fast path
    jax.block_until_ready((out_pallas, out_fast))
    assert out_pallas.shape == (batch, latent_dim)

    ref = _reference(z, a, params)
    assert jnp.allclose(out_pallas, ref, atol=5e-2, rtol=5e-2), (
        float(jnp.max(jnp.abs(out_pallas - ref))))
    assert jnp.allclose(out_fast, ref, atol=5e-2, rtol=5e-2), (
        float(jnp.max(jnp.abs(out_fast - ref))))

    # --- Moderate batch: exercises batch tiling (>=2 grid steps) on the kernel.
    batch2 = 260  # not a multiple of the tile -> also checks batch padding
    kz2, ka2 = jax.random.split(jax.random.PRNGKey(1))
    z2 = jax.random.normal(kz2, (batch2, latent_dim), jnp.float32)
    a2 = jax.random.normal(ka2, (batch2, action_dim), jnp.float32)

    out2 = dynamics_predictor_forward(z2, a2, params, force_pallas=True)
    jax.block_until_ready(out2)
    assert out2.shape == (batch2, latent_dim)
    ref2 = _reference(z2, a2, params)
    assert jnp.allclose(out2, ref2, atol=5e-2, rtol=5e-2), (
        float(jnp.max(jnp.abs(out2 - ref2))))

    print("KERNEL_OK")
</pallas_src>

<mosaic_0001>
module attributes {stable_mosaic.version = 11 : i64} {
  func.func @_mlp_kernel(%arg0: i32, %arg1: memref<8x32xf32, #tpu.memory_space<vmem>>, %arg2: memref<8x8xf32, #tpu.memory_space<vmem>>, %arg3: memref<32x128xbf16, #tpu.memory_space<vmem>>, %arg4: memref<8x128xbf16, #tpu.memory_space<vmem>>, %arg5: memref<1x128xf32, #tpu.memory_space<vmem>>, %arg6: memref<128x128xbf16, #tpu.memory_space<vmem>>, %arg7: memref<1x128xf32, #tpu.memory_space<vmem>>, %arg8: memref<128x32xbf16, #tpu.memory_space<vmem>>, %arg9: memref<1x32xf32, #tpu.memory_space<vmem>>, %arg10: memref<8x32xf32, #tpu.memory_space<vmem>>) attributes {dimension_semantics = [#tpu.dimension_semantics<parallel>], iteration_bounds = array<i64: 1>, scalar_prefetch = 0 : i64, scratch_operands = 0 : i64, tpu.core_type = #tpu.core_type<tc>, window_params = [{transform_indices = @transform_0, window_bounds = array<i64: 8, 32>}, {transform_indices = @transform_1, window_bounds = array<i64: 8, 8>}, {pipeline_mode = #tpu.pipeline_mode<synchronous>, transform_indices = @transform_2, window_bounds = array<i64: 32, 128>}, {pipeline_mode = #tpu.pipeline_mode<synchronous>, transform_indices = @transform_3, window_bounds = array<i64: 8, 128>}, {pipeline_mode = #tpu.pipeline_mode<synchronous>, transform_indices = @transform_4, window_bounds = array<i64: 1, 128>}, {pipeline_mode = #tpu.pipeline_mode<synchronous>, transform_indices = @transform_5, window_bounds = array<i64: 128, 128>}, {pipeline_mode = #tpu.pipeline_mode<synchronous>, transform_indices = @transform_6, window_bounds = array<i64: 1, 128>}, {pipeline_mode = #tpu.pipeline_mode<synchronous>, transform_indices = @transform_7, window_bounds = array<i64: 128, 32>}, {pipeline_mode = #tpu.pipeline_mode<synchronous>, transform_indices = @transform_8, window_bounds = array<i64: 1, 32>}, {transform_indices = @transform_9, window_bounds = array<i64: 8, 32>}]} {
    %c0 = arith.constant 0 : index
    %c0_0 = arith.constant 0 : index
    %0 = vector.load %arg1[%c0, %c0_0] : memref<8x32xf32, #tpu.memory_space<vmem>>, vector<8x32xf32>
    %1 = arith.truncf %0 : vector<8x32xf32> to vector<8x32xbf16>
    %c0_1 = arith.constant 0 : index
    %c0_2 = arith.constant 0 : index
    %2 = vector.load %arg2[%c0_1, %c0_2] : memref<8x8xf32, #tpu.memory_space<vmem>>, vector<8x8xf32>
    %3 = arith.truncf %2 : vector<8x8xf32> to vector<8x8xbf16>
    %c0_3 = arith.constant 0 : index
    %c0_4 = arith.constant 0 : index
    %4 = vector.load %arg3[%c0_3, %c0_4] : memref<32x128xbf16, #tpu.memory_space<vmem>>, vector<32x128xbf16>
    %cst = arith.constant dense<0.000000e+00> : vector<8x128xf32>
    %5 = tpu.matmul %1, %4, %cst {dimension_numbers = #tpu.dot_dimension_numbers<[1], [0], [0], [1], [0, 0, 1, 1], [], []>} : vector<8x32xbf16>, vector<32x128xbf16>, vector<8x128xf32> -> vector<8x128xf32>
    %c0_5 = arith.constant 0 : index
    %c0_6 = arith.constant 0 : index
    %6 = vector.load %arg4[%c0_5, %c0_6] : memref<8x128xbf16, #tpu.memory_space<vmem>>, vector<8x128xbf16>
    %cst_7 = arith.constant dense<0.000000e+00> : vector<8x128xf32>
    %7 = tpu.matmul %3, %6, %cst_7 {dimension_numbers = #tpu.dot_dimension_numbers<[1], [0], [0], [1], [0, 0, 1, 1], [], []>} : vector<8x8xbf16>, vector<8x128xbf16>, vector<8x128xf32> -> vector<8x128xf32>
    %8 = arith.addf %5, %7 : vector<8x128xf32>
    %c0_8 = arith.constant 0 : index
    %c0_9 = arith.constant 0 : index
    %9 = vector.load %arg5[%c0_8, %c0_9] : memref<1x128xf32, #tpu.memory_space<vmem>>, vector<1x128xf32>
    %10 = vector.broadcast %9 : vector<1x128xf32> to vector<8x128xf32>
    %11 = arith.addf %8, %10 : vector<8x128xf32>
    %cst_10 = arith.constant 0.000000e+00 : f32
    %12 = vector.broadcast %cst_10 : f32 to vector<8x128xf32>
    %13 = arith.maximumf %11, %12 : vector<8x128xf32>
    %14 = arith.truncf %13 : vector<8x128xf32> to vector<8x128xbf16>
    %c0_11 = arith.constant 0 : index
    %c0_12 = arith.constant 0 : index
    %15 = vector.load %arg6[%c0_11, %c0_12] : memref<128x128xbf16, #tpu.memory_space<vmem>>, vector<128x128xbf16>
    %cst_13 = arith.constant dense<0.000000e+00> : vector<8x128xf32>
    %16 = tpu.matmul %14, %15, %cst_13 {dimension_numbers = #tpu.dot_dimension_numbers<[1], [0], [0], [1], [0, 0, 1, 1], [], []>} : vector<8x128xbf16>, vector<128x128xbf16>, vector<8x128xf32> -> vector<8x128xf32>
    %c0_14 = arith.constant 0 : index
    %c0_15 = arith.constant 0 : index
    %17 = vector.load %arg7[%c0_14, %c0_15] : memref<1x128xf32, #tpu.memory_space<vmem>>, vector<1x128xf32>
    %18 = vector.broadcast %17 : vector<1x128xf32> to vector<8x128xf32>
    %19 = arith.addf %16, %18 : vector<8x128xf32>
    %cst_16 = arith.constant 0.000000e+00 : f32
    %20 = vector.broadcast %cst_16 : f32 to vector<8x128xf32>
    %21 = arith.maximumf %19, %20 : vector<8x128xf32>
    %22 = arith.truncf %21 : vector<8x128xf32> to vector<8x128xbf16>
    %c0_17 = arith.constant 0 : index
    %c0_18 = arith.constant 0 : index
    %23 = vector.load %arg8[%c0_17, %c0_18] : memref<128x32xbf16, #tpu.memory_space<vmem>>, vector<128x32xbf16>
    %cst_19 = arith.constant dense<0.000000e+00> : vector<8x32xf32>
    %24 = tpu.matmul %22, %23, %cst_19 {dimension_numbers = #tpu.dot_dimension_numbers<[1], [0], [0], [1], [0, 0, 1, 1], [], []>} : vector<8x128xbf16>, vector<128x32xbf16>, vector<8x32xf32> -> vector<8x32xf32>
    %c0_20 = arith.constant 0 : index
    %c0_21 = arith.constant 0 : index
    %25 = vector.load %arg9[%c0_20, %c0_21] : memref<1x32xf32, #tpu.memory_space<vmem>>, vector<1x32xf32>
    %26 = vector.broadcast %25 : vector<1x32xf32> to vector<8x32xf32>
    %27 = arith.addf %24, %26 : vector<8x32xf32>
    %c0_22 = arith.constant 0 : index
    %c0_23 = arith.constant 0 : index
    %28 = vector.load %arg10[%c0_22, %c0_23] : memref<8x32xf32, #tpu.memory_space<vmem>>, vector<8x32xf32>
    tpu.vector_store %arg10[%c0_22, %c0_23], %27 {strides = array<i32>} : memref<8x32xf32, #tpu.memory_space<vmem>>, vector<8x32xf32>,
    return
  }
  func.func @transform_0(%arg0: i32) -> (i32, i32) {
    %c0_i32 = arith.constant 0 : i32
    %c0_i32_0 = arith.constant 0 : i32
    return %arg0, %c0_i32 : i32, i32
  }
  func.func @transform_1(%arg0: i32) -> (i32, i32) {
    %c0_i32 = arith.constant 0 : i32
    %c0_i32_0 = arith.constant 0 : i32
    return %arg0, %c0_i32 : i32, i32
  }
  func.func @transform_2(%arg0: i32) -> (i32, i32) {
    %c0_i32 = arith.constant 0 : i32
    %c0_i32_0 = arith.constant 0 : i32
    %c0_i32_1 = arith.constant 0 : i32
    return %c0_i32, %c0_i32_0 : i32, i32
  }
  func.func @transform_3(%arg0: i32) -> (i32, i32) {
    %c0_i32 = arith.constant 0 : i32
    %c0_i32_0 = arith.constant 0 : i32
    %c0_i32_1 = arith.constant 0 : i32
    return %c0_i32, %c0_i32_0 : i32, i32
  }
  func.func @transform_4(%arg0: i32) -> (i32, i32) {
    %c0_i32 = arith.constant 0 : i32
    %c0_i32_0 = arith.constant 0 : i32
    %c0_i32_1 = arith.constant 0 : i32
    return %c0_i32, %c0_i32_0 : i32, i32
  }
  func.func @transform_5(%arg0: i32) -> (i32, i32) {
    %c0_i32 = arith.constant 0 : i32
    %c0_i32_0 = arith.constant 0 : i32
    %c0_i32_1 = arith.constant 0 : i32
    return %c0_i32, %c0_i32_0 : i32, i32
  }
  func.func @transform_6(%arg0: i32) -> (i32, i32) {
    %c0_i32 = arith.constant 0 : i32
    %c0_i32_0 = arith.constant 0 : i32
    %c0_i32_1 = arith.constant 0 : i32
    return %c0_i32, %c0_i32_0 : i32, i32
  }
  func.func @transform_7(%arg0: i32) -> (i32, i32) {
    %c0_i32 = arith.constant 0 : i32
    %c0_i32_0 = arith.constant 0 : i32
    %c0_i32_1 = arith.constant 0 : i32
    return %c0_i32, %c0_i32_0 : i32, i32
  }
  func.func @transform_8(%arg0: i32) -> (i32, i32) {
    %c0_i32 = arith.constant 0 : i32
    %c0_i32_0 = arith.constant 0 : i32
    %c0_i32_1 = arith.constant 0 : i32
    return %c0_i32, %c0_i32_0 : i32, i32
  }
  func.func @transform_9(%arg0: i32) -> (i32, i32) {
    %c0_i32 = arith.constant 0 : i32
    %c0_i32_0 = arith.constant 0 : i32
    return %arg0, %c0_i32 : i32, i32
  }
}

</mosaic_0001>

<llo_original>
// kernel: tpu_custom_call.1
$region0: #{tpu_custom_call.1}
  #allocation0 [shape = 'u32[]', space=smem, size = 0x4, offset = 0x4, fixed_abs, tag = 'smem constant byte address 0x4 - core index']
  #allocation1 [shape = 'u32[72,128]{1,0:T(1,128)}', space=vmem, size = 0x9000, scoped, tag = 'internal scratch']
  %s0 = inlined_call_operand.hbm [shape: f32[8,32], index: 0, kind: input, shape index: {}]
  %s1 = inlined_call_operand.hbm [shape: f32[8,8], index: 1, kind: input, shape index: {}]
  %s2 = inlined_call_operand.vmem [shape: bf16[32,128], index: 2, kind: input, shape index: {}]
  %s3 = inlined_call_operand.vmem [shape: bf16[8,128], index: 3, kind: input, shape index: {}]
  %s4 = inlined_call_operand.hbm [shape: f32[1,128], index: 4, kind: input, shape index: {}]
  %s5 = inlined_call_operand.vmem [shape: bf16[128,128], index: 5, kind: input, shape index: {}]
  %s6 = inlined_call_operand.vmem [shape: f32[1,128], index: 6, kind: input, shape index: {}]
  %s7 = inlined_call_operand.vmem [shape: bf16[128,32], index: 7, kind: input, shape index: {}]
  %s8 = inlined_call_operand.vmem [shape: f32[1,32], index: 8, kind: input, shape index: {}]
  %s9 = inlined_call_operand.hbm [shape: f32[8,32], index: 9, kind: output, shape index: {}]
  %s10 = sld [smem:[#allocation0]]
  $region58: #{tpu_custom_call.1} parent=0
    _
  %s12 = ssub.s32 1, %s10
  %s13 = scalar_select 0, %s12, %s10
  $region1: #{tpu_custom_call.1} parent=0
    #allocation2 [shape = 'u8[4096]{0}', space=vmem, size = 0x1000, scoped, tag = 'input window, operand 0, single buffered']
    #allocation3 [shape = 's32[1]{0}', space=sflag, size = 0x4, scoped, tag = 'scoped memory for tpu_custom_call.1']
    #allocation4 [shape = 's32[1]{0}', space=sflag, size = 0x4, scoped, tag = 'scoped memory for tpu_custom_call.1']
    #allocation5 [shape = 'u8[4096]{0}', space=vmem, size = 0x1000, scoped, tag = 'input window, operand 1, single buffered']
    #allocation6 [shape = 's32[1]{0}', space=sflag, size = 0x4, scoped, tag = 'scoped memory for tpu_custom_call.1']
    #allocation7 [shape = 'u8[512]{0}', space=vmem, size = 0x400, scoped, tag = 'input window, operand 4, single buffered']
    #allocation8 [shape = 'u8[4096]{0}', space=vmem, size = 0x1000, scoped, tag = 'output window, operand 0, single buffered']
    %14 = vsyncpa [#allocation3], 0
    %15 = vsyncpa [#allocation6], 0
    %16 = vsyncpa [#allocation4], 0
    // Predicated region
    $region2: #{tpu_custom_call.1} parent=1 // pred_check
      _
    $region3: #{tpu_custom_call.1} parent=1 // pred_check_branch
      %18 = sbr.rel (0) target = $region5
    $region4: #{tpu_custom_call.1} parent=1 // pred_region
      %20 = vsyncadd [#allocation3], 0
      %s22 = sshll.u32 %s0, 4
      %s23 = int_to_ptr.hbm [resolvable:$true] %s22
      %s24 = sshll.u32 [#allocation2], 4
      %s25 = int_to_ptr.vmem [resolvable:$true] %s24
      %27 = dma.hbm_to_vmem [thread:$0]  %s23, 128, %s25, [#allocation3]
    $region5: #{tpu_custom_call.1} parent=1 // pred_fallthru
      _
    // Predicated region
    $region6: #{tpu_custom_call.1} parent=1 // pred_check
      _
    $region7: #{tpu_custom_call.1} parent=1 // pred_check_branch
      %29 = sbr.rel (0) target = $region9
    $region8: #{tpu_custom_call.1} parent=1 // pred_region
      %31 = vsyncadd [#allocation6], 0
      %s33 = sshll.u32 %s1, 4
      %s34 = int_to_ptr.hbm [resolvable:$true] %s33
      %s35 = sshll.u32 [#allocation5], 4
      %s36 = int_to_ptr.vmem [resolvable:$true] %s35
      %38 = dma.hbm_to_vmem [thread:$0]  %s34, 128, %s36, [#allocation6]
    $region9: #{tpu_custom_call.1} parent=1 // pred_fallthru
      _
    // Predicated region
    $region10: #{tpu_custom_call.1} parent=1 // pred_check
      _
    $region11: #{tpu_custom_call.1} parent=1 // pred_check_branch
      %40 = sbr.rel (0) target = $region13
    $region12: #{tpu_custom_call.1} parent=1 // pred_region
      _
    $region13: #{tpu_custom_call.1} parent=1 // pred_fallthru
      _
    // Predicated region
    $region14: #{tpu_custom_call.1} parent=1 // pred_check
      _
    $region15: #{tpu_custom_call.1} parent=1 // pred_check_branch
      %42 = sbr.rel (0) target = $region17
    $region16: #{tpu_custom_call.1} parent=1 // pred_region
      _
    $region17: #{tpu_custom_call.1} parent=1 // pred_fallthru
      _
    // Predicated region
    $region18: #{tpu_custom_call.1} parent=1 // pred_check
      _
    $region19: #{tpu_custom_call.1} parent=1 // pred_check_branch
      %44 = sbr.rel (0) target = $region21
    $region20: #{tpu_custom_call.1} parent=1 // pred_region
      %46 = vsyncadd [#allocation6], 0
      %s48 = sshll.u32 %s4, 4
      %s49 = int_to_ptr.hbm [resolvable:$true] %s48
      %s50 = sshll.u32 [#allocation7], 4
      %s51 = int_to_ptr.vmem [resolvable:$true] %s50
      %53 = dma.hbm_to_vmem [thread:$0]  %s49, 16, %s51, [#allocation6]
    $region21: #{tpu_custom_call.1} parent=1 // pred_fallthru
      _
    // Predicated region
    $region22: #{tpu_custom_call.1} parent=1 // pred_check
      _
    $region23: #{tpu_custom_call.1} parent=1 // pred_check_branch
      %55 = sbr.rel (0) target = $region25
    $region24: #{tpu_custom_call.1} parent=1 // pred_region
      _
    $region25: #{tpu_custom_call.1} parent=1 // pred_fallthru
      _
    // Predicated region
    $region26: #{tpu_custom_call.1} parent=1 // pred_check
      _
    $region27: #{tpu_custom_call.1} parent=1 // pred_check_branch
      %57 = sbr.rel (0) target = $region29
    $region28: #{tpu_custom_call.1} parent=1 // pred_region
      _
    $region29: #{tpu_custom_call.1} parent=1 // pred_fallthru
      _
    // Predicated region
    $region30: #{tpu_custom_call.1} parent=1 // pred_check
      _
    $region31: #{tpu_custom_call.1} parent=1 // pred_check_branch
      %59 = sbr.rel (0) target = $region33
    $region32: #{tpu_custom_call.1} parent=1 // pred_region
      _
    $region33: #{tpu_custom_call.1} parent=1 // pred_fallthru
      _
    // Predicated region
    $region34: #{tpu_custom_call.1} parent=1 // pred_check
      _
    $region35: #{tpu_custom_call.1} parent=1 // pred_check_branch
      %61 = sbr.rel (0) target = $region37
    $region36: #{tpu_custom_call.1} parent=1 // pred_region
      _
    $region37: #{tpu_custom_call.1} parent=1 // pred_fallthru
      _
    // Predicated region
    $region38: #{tpu_custom_call.1} parent=1 // pred_check
      _
    $region39: #{tpu_custom_call.1} parent=1 // pred_check_branch
      %63 = sbr.rel (0) target = $region41
    $region40: #{tpu_custom_call.1} parent=1 // pred_region
      %65 = dma.done [#allocation3], 128
    $region41: #{tpu_custom_call.1} parent=1 // pred_fallthru
      _
    // Predicated region
    $region42: #{tpu_custom_call.1} parent=1 // pred_check
      _
    $region43: #{tpu_custom_call.1} parent=1 // pred_check_branch
      %67 = sbr.rel (0) target = $region45
    $region44: #{tpu_custom_call.1} parent=1 // pred_region
      %69 = dma.done [#allocation6], 128
    $region45: #{tpu_custom_call.1} parent=1 // pred_fallthru
      _
    // Predicated region
    $region46: #{tpu_custom_call.1} parent=1 // pred_check
      _
    $region47: #{tpu_custom_call.1} parent=1 // pred_check_branch
      %71 = sbr.rel (0) target = $region49
    $region48: #{tpu_custom_call.1} parent=1 // pred_region
      %73 = dma.done [#allocation6], 16
    $region49: #{tpu_custom_call.1} parent=1 // pred_fallthru
      _
    %v75 = vld [vmem:[#allocation2] sm:$0xff]
    %v76 = vpack.c.bf16 %v75, %v75
    %v77 = vld [vmem:[#allocation5] sm:$0xff]
    %v78 = vpack.c.bf16 %v77, %v77
    %v79 = vld [vmem:[%s2] sm:$0xf]
    %v80 = vld [vmem:[%s2 + $0x4] sm:$0xf]
    %v81 = vld [vmem:[%s2 + $0x8] sm:$0xf]
    %v82 = vld [vmem:[%s2 + $0xc] sm:$0xf]
    %v83 = vld [vmem:[%s3] sm:$0xf]
    %vm84 = vcmask 64512
    %v86 = vsel %vm84, %v78, 0
    %vm88 = vcmask 1043456
    %v90 = vsel %vm88, %v83, 0
    %92 = vmatpush.bf16.msra.mxu0 0
    %93 = vmatpush.bf16.msra.mxu0 0
    %94 = vmatpush.bf16.msra.mxu0 0
    %95 = vmatpush.bf16.msra.mxu0 0
    %96 = vmatpush.bf16.msra.mxu0 0
    %97 = vmatpush.bf16.msra.mxu0 0
    %98 = vmatpush.bf16.msra.mxu0 0
    %99 = vmatpush.bf16.msra.mxu0 %v90
    %100 = vmatmul.bf16.gmra.mxu0 %v86
    %v101 = vpop.f32.mrf.mxu0
    %v102 = vadd.f32 0.0, %v101
    %v103 = vpop.f32.mrf.mxu0
    %104 = vdwg.mxu0
    %v109 = vunpack.c.l.b16 %v79
    %v110 = vunpack.c.l.b16 %v80
    %v111 = vunpack.c.l.b16 %v81
    %v112 = vunpack.c.l.b16 %v82
    %v113 = vpack.c.b16 %v110, %v109
    %v114 = vpack.c.b16 %v112, %v111
    %vm117 = vcmask 261120
    %v119 = vsel %vm117, %v76, 0
    %121 = vmatpush.bf16.msra.mxu0 0
    %122 = vmatpush.bf16.msra.mxu0 0
    %123 = vmatpush.bf16.msra.mxu0 0
    %124 = vmatpush.bf16.msra.mxu0 0
    %125 = vmatpush.bf16.msra.mxu0 0
    %126 = vmatpush.bf16.msra.mxu0 0
    %127 = vmatpush.bf16.msra.mxu0 %v114
    %128 = vmatpush.bf16.msra.mxu0 %v113
    %129 = vmatmul.bf16.gmra.mxu0 %v119
    %v130 = vpop.f32.mrf.mxu0
    %v131 = vadd.f32 %v102, %v130
    %v132 = vpop.f32.mrf.mxu0
    %133 = vdwg.mxu0
    %v134 = vld [vmem:[#allocation7] sm:$0x1]
    %v136 = vperm.slane %v134, 0
    %v138 = vadd.f32 %v131, %v136
    %v139 = vmax.f32 %v138, 0.0
    %v140 = vpack.c.bf16 %v139, %v139
    %v141 = vld [vmem:[%s5] sm:$0xf]
    %v142 = vld [vmem:[%s5 + $0x4] sm:$0xf]
    %v143 = vld [vmem:[%s5 + $0x8] sm:$0xf]
    %v144 = vld [vmem:[%s5 + $0xc] sm:$0xf]
    %v145 = vld [vmem:[%s5 + $0x10] sm:$0xf]
    %v146 = vld [vmem:[%s5 + $0x14] sm:$0xf]
    %v147 = vld [vmem:[%s5 + $0x18] sm:$0xf]
    %v148 = vld [vmem:[%s5 + $0x1c] sm:$0xf]
    %v149 = vld [vmem:[%s5 + $0x20] sm:$0xf]
    %v150 = vld [vmem:[%s5 + $0x24] sm:$0xf]
    %v151 = vld [vmem:[%s5 + $0x28] sm:$0xf]
    %v152 = vld [vmem:[%s5 + $0x2c] sm:$0xf]
    %v153 = vld [vmem:[%s5 + $0x30] sm:$0xf]
    %v154 = vld [vmem:[%s5 + $0x34] sm:$0xf]
    %v155 = vld [vmem:[%s5 + $0x38] sm:$0xf]
    %v156 = vld [vmem:[%s5 + $0x3c] sm:$0xf]
    %v157 = vld [vmem:[%s6] sm:$0x1]
    %v159 = vperm.slane %v157, 0
    %v177 = vunpack.c.l.b16 %v141
    %v178 = vunpack.c.l.b16 %v142
    %v179 = vunpack.c.l.b16 %v143
    %v180 = vunpack.c.l.b16 %v144
    %v181 = vunpack.c.l.b16 %v145
    %v182 = vunpack.c.l.b16 %v146
    %v183 = vunpack.c.l.b16 %v147
    %v184 = vunpack.c.l.b16 %v148
    %v185 = vunpack.c.l.b16 %v149
    %v186 = vunpack.c.l.b16 %v150
    %v187 = vunpack.c.l.b16 %v151
    %v188 = vunpack.c.l.b16 %v152
    %v189 = vunpack.c.l.b16 %v153
    %v190 = vunpack.c.l.b16 %v154
    %v191 = vunpack.c.l.b16 %v155
    %v192 = vunpack.c.l.b16 %v156
    %v193 = vpack.c.b16 %v178, %v177
    %v194 = vpack.c.b16 %v180, %v179
    %v195 = vpack.c.b16 %v182, %v181
    %v196 = vpack.c.b16 %v184, %v183
    %v197 = vpack.c.b16 %v186, %v185
    %v198 = vpack.c.b16 %v188, %v187
    %v199 = vpack.c.b16 %v190, %v189
    %v200 = vpack.c.b16 %v192, %v191
    %209 = vmatpush.bf16.msra.mxu0 %v200
    %210 = vmatpush.bf16.msra.mxu0 %v199
    %211 = vmatpush.bf16.msra.mxu0 %v198
    %212 = vmatpush.bf16.msra.mxu0 %v197
    %213 = vmatpush.bf16.msra.mxu0 %v196
    %214 = vmatpush.bf16.msra.mxu0 %v195
    %215 = vmatpush.bf16.msra.mxu0 %v194
    %216 = vmatpush.bf16.msra.mxu0 %v193
    %217 = vmatmul.bf16.gmra.mxu0 %v140
    %v218 = vpop.f32.mrf.mxu0
    %v219 = vadd.f32 %v159, %v218
    %v220 = vpop.f32.mrf.mxu0
    %221 = vdwg.mxu0
    %v222 = vmax.f32 %v219, 0.0
    %v223 = vpack.c.bf16 %v222, %v222
    %v224 = vld [vmem:[%s7] sm:$0xf]
    %v225 = vld [vmem:[%s7 + $0x4] sm:$0xf]
    %v226 = vld [vmem:[%s7 + $0x8] sm:$0xf]
    %v227 = vld [vmem:[%s7 + $0xc] sm:$0xf]
    %v228 = vld [vmem:[%s7 + $0x10] sm:$0xf]
    %v229 = vld [vmem:[%s7 + $0x14] sm:$0xf]
    %v230 = vld [vmem:[%s7 + $0x18] sm:$0xf]
    %v231 = vld [vmem:[%s7 + $0x1c] sm:$0xf]
    %v232 = vld [vmem:[%s7 + $0x20] sm:$0xf]
    %v233 = vld [vmem:[%s7 + $0x24] sm:$0xf]
    %v234 = vld [vmem:[%s7 + $0x28] sm:$0xf]
    %v235 = vld [vmem:[%s7 + $0x2c] sm:$0xf]
    %v236 = vld [vmem:[%s7 + $0x30] sm:$0xf]
    %v237 = vld [vmem:[%s7 + $0x34] sm:$0xf]
    %v238 = vld [vmem:[%s7 + $0x38] sm:$0xf]
    %v239 = vld [vmem:[%s7 + $0x3c] sm:$0xf]
    %v240 = vld [vmem:[%s8] sm:$0x1]
    %v242 = vperm.slane %v240, 0
    %v260 = vunpack.c.l.b16 %v224
    %v261 = vunpack.c.l.b16 %v225
    %v262 = vunpack.c.l.b16 %v226
    %v263 = vunpack.c.l.b16 %v227
    %v264 = vunpack.c.l.b16 %v228
    %v265 = vunpack.c.l.b16 %v229
    %v266 = vunpack.c.l.b16 %v230
    %v267 = vunpack.c.l.b16 %v231
    %v268 = vunpack.c.l.b16 %v232
    %v269 = vunpack.c.l.b16 %v233
    %v270 = vunpack.c.l.b16 %v234
    %v271 = vunpack.c.l.b16 %v235
    %v272 = vunpack.c.l.b16 %v236
    %v273 = vunpack.c.l.b16 %v237
    %v274 = vunpack.c.l.b16 %v238
    %v275 = vunpack.c.l.b16 %v239
    %v276 = vpack.c.b16 %v261, %v260
    %v277 = vpack.c.b16 %v263, %v262
    %v278 = vpack.c.b16 %v265, %v264
    %v279 = vpack.c.b16 %v267, %v266
    %v280 = vpack.c.b16 %v269, %v268
    %v281 = vpack.c.b16 %v271, %v270
    %v282 = vpack.c.b16 %v273, %v272
    %v283 = vpack.c.b16 %v275, %v274
    %292 = vmatpush.bf16.msra.mxu0 %v283
    %293 = vmatpush.bf16.msra.mxu0 %v282
    %294 = vmatpush.bf16.msra.mxu0 %v281
    %295 = vmatpush.bf16.msra.mxu0 %v280
    %296 = vmatpush.bf16.msra.mxu0 %v279
    %297 = vmatpush.bf16.msra.mxu0 %v278
    %298 = vmatpush.bf16.msra.mxu0 %v277
    %299 = vmatpush.bf16.msra.mxu0 %v276
    %300 = vmatmul.bf16.gmra.mxu0 %v223
    %v301 = vpop.f32.mrf.mxu0
    %v302 = vadd.f32 %v242, %v301
    %v303 = vpop.f32.mrf.mxu0
    %304 = vdwg.mxu0
    %305 = vst.msk [vmem:[#allocation8] sm:$0xff] %vm117, %v302
    // Predicated region
    $region50: #{tpu_custom_call.1} parent=1 // pred_check
      _
    $region51: #{tpu_custom_call.1} parent=1 // pred_check_branch
      %307 = sbr.rel (0) target = $region53
    $region52: #{tpu_custom_call.1} parent=1 // pred_region
      %309 = vsyncadd [#allocation4], 0
      %s311 = sshll.u32 [#allocation8], 4
      %s312 = int_to_ptr.vmem [resolvable:$true] %s311
      %s313 = sshll.u32 %s9, 4
      %s314 = int_to_ptr.hbm [resolvable:$true] %s313
      %316 = dma.vmem_to_hbm [thread:$0]  %s312, 128, %s314, [#allocation4]
    $region53: #{tpu_custom_call.1} parent=1 // pred_fallthru
      _
    // Predicated region
    $region54: #{tpu_custom_call.1} parent=1 // pred_check
      _
    $region55: #{tpu_custom_call.1} parent=1 // pred_check_branch
      %318 = sbr.rel (0) target = $region57
    $region56: #{tpu_custom_call.1} parent=1 // pred_region
      %320 = dma.done [#allocation4], 128
    $region57: #{tpu_custom_call.1} parent=1 // pred_fallthru
      _
    %321 = vsyncpa [#allocation3], 1
    %322 = vsyncpa [#allocation6], 1
    %323 = vsyncpa [#allocation4], 1

</llo_original>
